<compile_context>
chip_gen: v7x
topology: tpu7x:2x2x1
jax: 0.10.0
libtpu: 0.0.40
codegen_flags: <defaults>
</compile_context>

<pallas_src>
import jax
import jax.numpy as jnp
from jax.experimental import pallas as pl
from jax.experimental.pallas import tpu as pltpu


def _make_sine_stack_kernel(num_layers):
    """Kernel applying `num_layers` fused SineLayers to one row-tile of x.

    Refs: x_ref, (w_ref, b_ref) * num_layers, o_ref.
    omega_0 is pre-folded into every (w, b), so each layer is sin(act @ W' + b').
    The activation never leaves VMEM/vregs between layers; only the final
    activation is stored to HBM.
    """

    def kernel(*refs):
        x_ref = refs[0]
        o_ref = refs[1 + 2 * num_layers]
        act = x_ref[...]
        for layer in range(num_layers):
            w_ref = refs[1 + 2 * layer]
            b_ref = refs[2 + 2 * layer]
            # Cast the MXU lhs to the weight dtype at the dot (in-VMEM, zero extra
            # HBM traffic).  bf16 x bf16 keeps the MXU on its native fast path;
            # f32 weights keep the whole layer in f32.
            lhs = act.astype(w_ref.dtype)
            y = jnp.dot(lhs, w_ref[...], preferred_element_type=jnp.float32)
            y = y + b_ref[...]                # bias add in f32
            act = jnp.sin(y)                  # sine in f32
        o_ref[...] = act.astype(o_ref.dtype)

    return kernel


def prepare_sine_layer_params(weight, bias, omega_0, *, dot_in_bf16=True):
    """One-time transform from PyTorch layout to kernel layout (NOT per call).

    PyTorch: weight (out_features, in_features), bias (out_features,).
    Kernel:  W' = (omega_0 * weight).T  -> (in_features, out_features)
             b' = (omega_0 * bias)[None, :]
    Uses sin(omega*(x@W.T + b)) == sin(x @ (omega*W).T + omega*b).

    dot_in_bf16=True stores W' in bf16 (halves its DMA, native MXU path); the bias
    stays f32.  Use False where the bf16 phase error inside sin is not acceptable.
    """
    w_t = jnp.asarray(weight, jnp.float32).T * jnp.float32(omega_0)        # (K, N)
    b2d = (jnp.asarray(bias, jnp.float32) * jnp.float32(omega_0)).reshape(1, -1)
    if dot_in_bf16:
        w_t = w_t.astype(jnp.bfloat16)
    return w_t, b2d


def _min_sublane(dtype):
    # 8 rows for 4-byte dtypes, 16 for 2-byte (bf16), 32 for 1-byte.
    return max(8, 32 // jnp.dtype(dtype).itemsize)


def sine_stack(x2d, layers, *, tile_m=1024):
    """Apply a stack of SineLayers fused into one pallas_call.

    x2d    : (M, K0), leading dims flattened by the caller.
    layers : sequence of (w_t, b2d) from prepare_sine_layer_params,
             w_t: (K_l, N_l) with K_{l+1} == N_l, b2d: (1, N_l).
    """
    M, K0 = x2d.shape
    k = K0
    for w_t, b2d in layers:
        assert w_t.shape[0] == k and b2d.shape == (1, w_t.shape[1]), (
            w_t.shape, b2d.shape, k)
        k = w_t.shape[1]
    n_last = k
    num_layers = len(layers)
    out_dtype = x2d.dtype

    # ---- row tile: dtype-aware sublane rounding, >= 2 grid steps when possible.
    sub = _min_sublane(x2d.dtype)
    if M <= sub:
        tm = M                                  # full-dim block (exempt from 8x128 rule)
    else:
        tm = min(int(tile_m), M)
        half = ((pl.cdiv(M, 2) + sub - 1) // sub) * sub   # ensures grid_m >= 2 (v7x TCs)
        tm = max(sub, (min(tm, half) // sub) * sub)
    grid_m = pl.cdiv(M, tm)

    # ---- accurate per-step VMEM estimate (no 2x safety inflation).
    isz = lambda a: jnp.dtype(a.dtype).itemsize
    n_max = max(w.shape[1] for w, _ in layers)
    est = 2 * tm * K0 * isz(x2d)                          # double-buffered x tiles
    est += 2 * tm * n_last * jnp.dtype(out_dtype).itemsize  # double-buffered out tiles
    est += sum(2 * (w.size * isz(w) + b.size * isz(b)) for w, b in layers)  # resident W', b'
    est += 2 * tm * n_max * 4                             # live f32 intermediate activations
    est += 2 * (1 << 20)                                  # compiler-internal scratch margin
    try:
        vmem_phys = pltpu.get_tpu_info().vmem_capacity_bytes
    except Exception:                                     # conservative fallback (v7x per-TC)
        vmem_phys = 64 << 20
    cap = (vmem_phys * 3) // 4                            # 48 MiB on v7x, 96 MiB on v5e/v6e
    vmem_limit = int(min(max(est, 32 << 20), cap))

    # ---- advisory cost estimate for XLA's scheduler.
    flops = sum(2 * M * w.shape[0] * w.shape[1] for w, _ in layers)
    transcendentals = sum(M * w.shape[1] for w, _ in layers)
    bytes_accessed = (x2d.size * isz(x2d)
                      + M * n_last * jnp.dtype(out_dtype).itemsize
                      + sum(w.size * isz(w) + b.size * isz(b) for w, b in layers))
    cost = pl.CostEstimate(flops=flops, transcendentals=transcendentals,
                           bytes_accessed=bytes_accessed)

    # ---- block specs: streamed x/out rows, resident (constant index_map) W'/b'.
    in_specs = [pl.BlockSpec((tm, K0), lambda i: (i, 0))]
    for w_t, b2d in layers:
        kl, nl = w_t.shape
        in_specs.append(pl.BlockSpec((kl, nl), lambda i: (0, 0)))   # weight (resident)
        in_specs.append(pl.BlockSpec((1, nl), lambda i: (0, 0)))    # bias   (resident)
    out_specs = pl.BlockSpec((tm, n_last), lambda i: (i, 0))        # lane-dense full-N

    call = pl.pallas_call(
        _make_sine_stack_kernel(num_layers),
        out_shape=jax.ShapeDtypeStruct((M, n_last), out_dtype),
        grid_spec=pltpu.PrefetchScalarGridSpec(
            num_scalar_prefetch=0,
            grid=(grid_m,),
            in_specs=in_specs,
            out_specs=out_specs,
        ),
        compiler_params=pltpu.CompilerParams(
            dimension_semantics=("parallel",),   # shards row-tiles across v7x's 2 TCs
            vmem_limit_bytes=vmem_limit,
        ),
        cost_estimate=cost,
    )

    args = [x2d]
    for w_t, b2d in layers:
        args.append(w_t)
        args.append(b2d)
    return call(*args)


def sine_layer(x2d, w_t, b2d, *, tile_m=1024):
    """Single SineLayer: y = sin(x @ W' + b') with omega_0 pre-folded into W', b'."""
    return sine_stack(x2d, [(w_t, b2d)], tile_m=tile_m)


def init_sine_layer_params(key, in_features, out_features, *, is_first=False,
                           omega_0=30.0, dtype=jnp.float32):
    """Deterministic SIREN-style init matching the PyTorch __init__ (PyTorch layout)."""
    kw, kb = jax.random.split(key)
    if is_first:
        bound_w = 1.0 / in_features
    else:
        bound_w = float(jnp.sqrt(6.0 / in_features) / omega_0)
    weight = jax.random.uniform(
        kw, (out_features, in_features), dtype=dtype, minval=-bound_w, maxval=bound_w)
    bound_b = 1.0 / float(jnp.sqrt(in_features))   # nn.Linear default bias init
    bias = jax.random.uniform(
        kb, (out_features,), dtype=dtype, minval=-bound_b, maxval=bound_b)
    return weight, bias


if __name__ == "__main__":
    key = jax.random.PRNGKey(0)
    k_x, k0, k1, k2 = jax.random.split(key, 4)

    # Small shapes implied by the module: a batch of coordinate rows through
    # Linear(in_features=64, out_features=128) with sine activation.
    batch, seq, in_features, hidden = 2, 64, 64, 128
    omega_0 = 30.0

    x = jax.random.normal(k_x, (batch, seq, in_features), dtype=jnp.float32)
    x2d = x.reshape(batch * seq, in_features)        # Linear acts on the last dim

    w0, b0 = init_sine_layer_params(k0, in_features, hidden, is_first=True,
                                    omega_0=omega_0)

    def ref_layer(inp, w, b):
        # High-precision pure-JAX reference of the original (un-folded) module.
        return jnp.sin(omega_0 * (
            jnp.dot(inp, w.T, precision=jax.lax.Precision.HIGHEST) + b))

    # --- single layer, f32 weights (accuracy path) -------------------------------
    w_t32, b2d0 = prepare_sine_layer_params(w0, b0, omega_0, dot_in_bf16=False)
    out_f32 = sine_layer(x2d, w_t32, b2d0)
    jax.block_until_ready(out_f32)
    ref0 = ref_layer(x2d, w0, b0)
    assert out_f32.shape == (batch * seq, hidden)
    err_f32 = float(jnp.max(jnp.abs(out_f32 - ref0)))
    assert err_f32 < 1e-3, err_f32

    # --- single layer, bf16 MXU inputs (default fast path; omega-folded bf16 W'
    #     trades ~1e-2 of phase accuracy inside sin for the native MXU path) -----
    w_tbf, _ = prepare_sine_layer_params(w0, b0, omega_0, dot_in_bf16=True)
    out_bf16 = sine_layer(x2d, w_tbf, b2d0)
    jax.block_until_ready(out_bf16)
    err_bf16 = float(jnp.max(jnp.abs(out_bf16 - ref0)))
    assert err_bf16 < 1.5e-1, err_bf16

    # --- fused 3-layer SIREN stack (activations stay in VMEM between layers) -----
    w1, b1 = init_sine_layer_params(k1, hidden, hidden, is_first=False, omega_0=omega_0)
    w2, b2 = init_sine_layer_params(k2, hidden, hidden, is_first=False, omega_0=omega_0)
    fused_params = [prepare_sine_layer_params(w, b, omega_0, dot_in_bf16=False)
                    for (w, b) in ((w0, b0), (w1, b1), (w2, b2))]
    out_stack = sine_stack(x2d, fused_params).reshape(batch, seq, hidden)
    jax.block_until_ready(out_stack)
    ref_stack = ref_layer(ref_layer(ref_layer(x2d, w0, b0), w1, b1), w2, b2)
    ref_stack = ref_stack.reshape(batch, seq, hidden)
    err_stack = float(jnp.max(jnp.abs(out_stack - ref_stack)))
    assert out_stack.shape == (batch, seq, hidden)
    assert err_stack < 3e-3, err_stack

    print("KERNEL_OK")
</pallas_src>

<mosaic_0001>
module attributes {stable_mosaic.version = 11 : i64} {
  func.func @kernel(%arg0: i32, %arg1: memref<64x64xf32, #tpu.memory_space<vmem>>, %arg2: memref<64x128xf32, #tpu.memory_space<vmem>>, %arg3: memref<1x128xf32, #tpu.memory_space<vmem>>, %arg4: memref<64x128xf32, #tpu.memory_space<vmem>>) attributes {dimension_semantics = [#tpu.dimension_semantics<parallel>], iteration_bounds = array<i64: 2>, scalar_prefetch = 0 : i64, scratch_operands = 0 : i64, tpu.core_type = #tpu.core_type<tc>, window_params = [{transform_indices = @transform_0, window_bounds = array<i64: 64, 64>}, {pipeline_mode = #tpu.pipeline_mode<synchronous>, transform_indices = @transform_1, window_bounds = array<i64: 64, 128>}, {pipeline_mode = #tpu.pipeline_mode<synchronous>, transform_indices = @transform_2, window_bounds = array<i64: 1, 128>}, {transform_indices = @transform_3, window_bounds = array<i64: 64, 128>}]} {
    %c0 = arith.constant 0 : index
    %c0_0 = arith.constant 0 : index
    %0 = vector.load %arg1[%c0, %c0_0] : memref<64x64xf32, #tpu.memory_space<vmem>>, vector<64x64xf32>
    %c0_1 = arith.constant 0 : index
    %c0_2 = arith.constant 0 : index
    %1 = vector.load %arg2[%c0_1, %c0_2] : memref<64x128xf32, #tpu.memory_space<vmem>>, vector<64x128xf32>
    %cst = arith.constant dense<0.000000e+00> : vector<64x128xf32>
    %2 = tpu.matmul %0, %1, %cst {dimension_numbers = #tpu.dot_dimension_numbers<[1], [0], [0], [1], [0, 0, 1, 1], [], []>} : vector<64x64xf32>, vector<64x128xf32>, vector<64x128xf32> -> vector<64x128xf32>
    %c0_3 = arith.constant 0 : index
    %c0_4 = arith.constant 0 : index
    %3 = vector.load %arg3[%c0_3, %c0_4] : memref<1x128xf32, #tpu.memory_space<vmem>>, vector<1x128xf32>
    %4 = vector.broadcast %3 : vector<1x128xf32> to vector<64x128xf32>
    %5 = arith.addf %2, %4 : vector<64x128xf32>
    %6 = math.sin %5 : vector<64x128xf32>
    %c0_5 = arith.constant 0 : index
    %c0_6 = arith.constant 0 : index
    %7 = vector.load %arg4[%c0_5, %c0_6] : memref<64x128xf32, #tpu.memory_space<vmem>>, vector<64x128xf32>
    tpu.vector_store %arg4[%c0_5, %c0_6], %6 {strides = array<i32>} : memref<64x128xf32, #tpu.memory_space<vmem>>, vector<64x128xf32>,
    return
  }
  func.func @transform_0(%arg0: i32) -> (i32, i32) {
    %c0_i32 = arith.constant 0 : i32
    %c0_i32_0 = arith.constant 0 : i32
    return %arg0, %c0_i32 : i32, i32
  }
  func.func @transform_1(%arg0: i32) -> (i32, i32) {
    %c0_i32 = arith.constant 0 : i32
    %c0_i32_0 = arith.constant 0 : i32
    %c0_i32_1 = arith.constant 0 : i32
    return %c0_i32, %c0_i32_0 : i32, i32
  }
  func.func @transform_2(%arg0: i32) -> (i32, i32) {
    %c0_i32 = arith.constant 0 : i32
    %c0_i32_0 = arith.constant 0 : i32
    %c0_i32_1 = arith.constant 0 : i32
    return %c0_i32, %c0_i32_0 : i32, i32
  }
  func.func @transform_3(%arg0: i32) -> (i32, i32) {
    %c0_i32 = arith.constant 0 : i32
    %c0_i32_0 = arith.constant 0 : i32
    return %arg0, %c0_i32 : i32, i32
  }
}

</mosaic_0001>

<llo_original>
// kernel: tpu_custom_call.1
$region0: #{tpu_custom_call.1}
  #allocation0 [shape = 'u32[]', space=smem, size = 0x4, offset = 0x4, fixed_abs, tag = 'smem constant byte address 0x4 - core index']
  #allocation1 [shape = 'u32[144,128]{1,0:T(1,128)}', space=vmem, size = 0x12000, scoped, tag = 'internal scratch']
  %s0 = inlined_call_operand.vmem [shape: f32[128,64], index: 0, kind: input, shape index: {}]
  %s1 = inlined_call_operand.vmem [shape: f32[64,128], index: 1, kind: input, shape index: {}]
  %s2 = inlined_call_operand.vmem [shape: f32[1,128], index: 2, kind: input, shape index: {}]
  %s3 = inlined_call_operand.hbm [shape: f32[128,128], index: 3, kind: output, shape index: {}]
  %s4 = sld [smem:[#allocation0]]
  $region45: #{tpu_custom_call.1} parent=0
    _
  %s6 = ssub.s32 1, %s4
  %s7 = scalar_select 0, %s6, %s4
  $region1: #{tpu_custom_call.1} parent=0
    #allocation2 [shape = 'u8[65536]{0}', space=vmem, size = 0x10000, scoped, tag = 'output window, operand 0']
    #allocation3 [shape = 's32[2]{0}', space=sflag, size = 0x8, scoped, tag = 'scoped memory for tpu_custom_call.1']
    %8 = vsyncpa [#allocation3], 0
    %s9 = scalar_lea.sflag [#allocation3], 1
    %10 = vsyncpa %s9, 0
    loop: start=0, step=1, limit=4
    $region2: #{tpu_custom_call.1} parent=1 // loop_pre_header
      _
    $region3: #{tpu_custom_call.1} parent=1 // loop_header
      %s12 = sphi 0, %s16
      %p13 = scmp.ge.s32.totalorder %s12, 4
      %s22 = sphi 0, %s24
      %s25 = sphi 0, %s22
      %s26 = sphi 0, %s25
      %s42 = sphi 0, %s26
      %s46 = sphi 0, %s46
      %s48 = sphi 0, %s46
      %s49 = sphi 0, %s48
      %s63 = sphi 0, %s49
      %s67 = sphi 0, %s67
      %s69 = sphi 0, %s67
      %s70 = sphi 0, %s69
      %s84 = sphi 0, %s70
      %s90 = sphi 0, %s92
      %s93 = sphi 0, %s90
      %s94 = sphi 0, %s93
      %s110 = sphi 0, %s94
    $region4: #{tpu_custom_call.1} parent=1 // loop_header_branch
      %15 = sbr.rel (%p13) target = $region8
    $region5: #{tpu_custom_call.1} parent=1 // loop_body
      %s17 = ssub.s32 %s12, 1
      %s18 = ssub.s32 %s12, 2
      %s19 = sadd.s32 %s12, 1
      %s20 = ssub.s32 %s12, %s19
      %p21 = scmp.eq.s32.totalorder %s20, 0
      %s23 = sadd.s32 %s22, 1
      %s24 = scalar_select %p21, %s22, %s23
      %p27 = pneg %p21
      %p28 = scmp.eq.s32.totalorder %s12, 1
      %p29 = por %p27, %p28
      %p30 = scmp.ne.s32.totalorder %s22, %s25
      %p31 = scmp.eq.s32.totalorder %s12, 0
      %p32 = por %p30, %p31
      %p33 = scmp.ne.s32.totalorder %s22, %s25
      %p34 = scmp.eq.s32.totalorder %s17, 1
      %p35 = por %p33, %p34
      %p36 = scmp.ne.s32.totalorder %s25, %s26
      %p37 = scmp.eq.s32.totalorder %s17, 0
      %p38 = por %p36, %p37
      %p39 = scmp.ne.s32.totalorder %s25, %s26
      %p40 = scmp.eq.s32.totalorder %s18, 1
      %p41 = por %p39, %p40
      %p43 = scmp.ne.s32.totalorder %s26, %s42
      %p44 = scmp.eq.s32.totalorder %s18, 0
      %p45 = por %p43, %p44
      %s47 = sadd.s32 %s46, 1
      %p50 = scmp.eq.s32.totalorder %s12, 1
      %p51 = scmp.ne.s32.totalorder %s46, %s48
      %p52 = scmp.eq.s32.totalorder %s12, 0
      %p53 = por %p51, %p52
      %p54 = scmp.ne.s32.totalorder %s46, %s48
      %p55 = scmp.eq.s32.totalorder %s17, 1
      %p56 = por %p54, %p55
      %p57 = scmp.ne.s32.totalorder %s48, %s49
      %p58 = scmp.eq.s32.totalorder %s17, 0
      %p59 = por %p57, %p58
      %p60 = scmp.ne.s32.totalorder %s48, %s49
      %p61 = scmp.eq.s32.totalorder %s18, 1
      %p62 = por %p60, %p61
      %p64 = scmp.ne.s32.totalorder %s49, %s63
      %p65 = scmp.eq.s32.totalorder %s18, 0
      %p66 = por %p64, %p65
      %s68 = sadd.s32 %s67, 1
      %p71 = scmp.eq.s32.totalorder %s12, 1
      %p72 = scmp.ne.s32.totalorder %s67, %s69
      %p73 = scmp.eq.s32.totalorder %s12, 0
      %p74 = por %p72, %p73
      %p75 = scmp.ne.s32.totalorder %s67, %s69
      %p76 = scmp.eq.s32.totalorder %s17, 1
      %p77 = por %p75, %p76
      %p78 = scmp.ne.s32.totalorder %s69, %s70
      %p79 = scmp.eq.s32.totalorder %s17, 0
      %p80 = por %p78, %p79
      %p81 = scmp.ne.s32.totalorder %s69, %s70
      %p82 = scmp.eq.s32.totalorder %s18, 1
      %p83 = por %p81, %p82
      %p85 = scmp.ne.s32.totalorder %s70, %s84
      %p86 = scmp.eq.s32.totalorder %s18, 0
      %p87 = por %p85, %p86
      %s88 = ssub.s32 %s12, %s19
      %p89 = scmp.eq.s32.totalorder %s88, 0
      %s91 = sadd.s32 %s90, 1
      %s92 = scalar_select %p89, %s90, %s91
      %p95 = pneg %p89
      %p96 = scmp.eq.s32.totalorder %s12, 1
      %p97 = por %p95, %p96
      %p98 = scmp.ne.s32.totalorder %s90, %s93
      %p99 = scmp.eq.s32.totalorder %s12, 0
      %p100 = por %p98, %p99
      %p101 = scmp.ne.s32.totalorder %s90, %s93
      %p102 = scmp.eq.s32.totalorder %s17, 1
      %p103 = por %p101, %p102
      %p104 = scmp.ne.s32.totalorder %s93, %s94
      %p105 = scmp.eq.s32.totalorder %s17, 0
      %p106 = por %p104, %p105
      %p107 = scmp.ne.s32.totalorder %s93, %s94
      %p108 = scmp.eq.s32.totalorder %s18, 1
      %p109 = por %p107, %p108
      %p111 = scmp.ne.s32.totalorder %s94, %s110
      %p112 = scmp.eq.s32.totalorder %s18, 0
      %p113 = por %p111, %p112
      %p114 = scmp.le.s32.totalorder 1, %s12
      %p115 = scmp.lt.s32.totalorder %s12, 3
      %p116 = pnand %p114, %p115
      %p117 = pneg %p116
      // Predicated region
      $region9: #{tpu_custom_call.1} parent=5 // pred_check
        _
      $region10: #{tpu_custom_call.1} parent=5 // pred_check_branch
        %119 = sbr.rel (%p116) target = $region12
      $region11: #{tpu_custom_call.1} parent=5 // pred_region
        %s120 = ssub.s32 %s12, 1
        // Predicated region
        $region13: #{tpu_custom_call.1} parent=11 // pred_check
          %p121 = pneg %p59
        $region14: #{tpu_custom_call.1} parent=11 // pred_check_branch
          %123 = sbr.rel (%p121) target = $region16
        $region15: #{tpu_custom_call.1} parent=11 // pred_region
          _
        $region16: #{tpu_custom_call.1} parent=11 // pred_fallthru
          _
        // Predicated region
        $region17: #{tpu_custom_call.1} parent=11 // pred_check
          %p124 = pneg %p80
        $region18: #{tpu_custom_call.1} parent=11 // pred_check_branch
          %126 = sbr.rel (%p124) target = $region20
        $region19: #{tpu_custom_call.1} parent=11 // pred_region
          _
        $region20: #{tpu_custom_call.1} parent=11 // pred_fallthru
          _
      $region12: #{tpu_custom_call.1} parent=5 // pred_fallthru
        _
      %p127 = scmp.lt.s32.totalorder %s12, 2
      // Predicated region
      $region21: #{tpu_custom_call.1} parent=5 // pred_check
        %p128 = pneg %p127
      $region22: #{tpu_custom_call.1} parent=5 // pred_check_branch
        %130 = sbr.rel (%p128) target = $region24
      $region23: #{tpu_custom_call.1} parent=5 // pred_region
        // Predicated region
        $region25: #{tpu_custom_call.1} parent=23 // pred_check
          %p131 = pneg %p32
        $region26: #{tpu_custom_call.1} parent=23 // pred_check_branch
          %133 = sbr.rel (%p131) target = $region28
        $region27: #{tpu_custom_call.1} parent=23 // pred_region
          %s134 = smul.u32 8, %s12
          %p135 = scmp.lt.s32.totalorder %s134, 15
          %s136 = scalar_select %p135, %s134, 15
          %s137 = smul.addr %s136, 8
          %s138 = scalar_lea.vmem %s0, %s137
          %s139 = smul.u32 8, %s12
        $region28: #{tpu_custom_call.1} parent=23 // pred_fallthru
          _
      $region24: #{tpu_custom_call.1} parent=5 // pred_fallthru
        _
      %p140 = scmp.le.s32.totalorder 1, %s12
      %p141 = scmp.lt.s32.totalorder %s12, 3
      %p142 = pnand %p140, %p141
      %p143 = pneg %p142
      // Predicated region
      $region29: #{tpu_custom_call.1} parent=5 // pred_check
        _
      $region30: #{tpu_custom_call.1} parent=5 // pred_check_branch
        %145 = sbr.rel (%p142) target = $region32
      $region31: #{tpu_custom_call.1} parent=5 // pred_region
        %s146 = ssub.s32 %s12, 1
        %s147 = smul.u32 8, %s17
        %p148 = scmp.lt.s32.totalorder %s147, 15
        %s149 = scalar_select %p148, %s147, 15
        %s150 = smul.addr %s149, 8
        %s151 = scalar_lea.vmem %s0, %s150
        %p152 = pneg %p38
        %p153 = pneg %p35
        %p154 = pneg %p59
        %p155 = pneg %p56
        %p156 = pneg %p80
        %p157 = pneg %p77
        %p158 = pneg %p106
        %p159 = pneg %p103
        %s160 = sand.u32 %s93, 1
        %s161 = scalar_lea.sflag [#allocation3], %s160
        %s162 = sand.u32 %s93, 1
        %s163 = smul.addr %s162, 64
        %s164 = scalar_lea.vmem [#allocation2], %s163
        %s165 = smul.u32 8, %s17
        %p166 = scmp.lt.s32.totalorder %s165, 15
        %s167 = scalar_select %p166, %s165, 15
        %s168 = smul.addr %s167, 8
        %s169 = scalar_lea.vmem %s0, %s168
        %s170 = smul.u32 8, %s17
        %s171 = smul.u32 8, %s17
        %v172 = vld [vmem:[%s169] sm:$0xff]
        %v173 = vld [vmem:[%s169 + $0x8] sm:$0xff]
        %v174 = vld [vmem:[%s169 + $0x10] sm:$0xff]
        %v175 = vld [vmem:[%s169 + $0x18] sm:$0xff]
        %v176 = vld [vmem:[%s169 + $0x20] sm:$0xff]
        %v177 = vld [vmem:[%s169 + $0x28] sm:$0xff]
        %v178 = vld [vmem:[%s169 + $0x30] sm:$0xff]
        %v179 = vld [vmem:[%s169 + $0x38] sm:$0xff]
        %v180 = vld [vmem:[%s1] sm:$0xff]
        %v181 = vld [vmem:[%s1 + $0x8] sm:$0xff]
        %v182 = vld [vmem:[%s1 + $0x10] sm:$0xff]
        %v183 = vld [vmem:[%s1 + $0x18] sm:$0xff]
        %v184 = vld [vmem:[%s1 + $0x20] sm:$0xff]
        %v185 = vld [vmem:[%s1 + $0x28] sm:$0xff]
        %v186 = vld [vmem:[%s1 + $0x30] sm:$0xff]
        %v187 = vld [vmem:[%s1 + $0x38] sm:$0xff]
        %v188 = vld [vmem:[%s2] sm:$0x1]
        %v190 = vlaneseq
        %v191 = vshrl.u32 %v190, 7
        %v192 = vsub.s32 0, %v191
        %v193 = vrot.slane %v188, %v192
        %vm195 = vcmask 523264
        %v197 = vsel %vm195, %v172, 0
        %v200 = vsel %vm195, %v173, 0
        %v203 = vsel %vm195, %v174, 0
        %v206 = vsel %vm195, %v175, 0
        %v209 = vsel %vm195, %v176, 0
        %v212 = vsel %vm195, %v177, 0
        %v215 = vsel %vm195, %v178, 0
        %v218 = vsel %vm195, %v179, 0
        %220 = vmatprep.subr.mxu0 0.0
        %221 = vmatpush1.msra.mxu0 %v180
        %222 = vmatprep.subr.mxu0 0.0
        %223 = vmatpush1.msra.mxu0 %v181
        %224 = vmatprep.subr.mxu0 0.0
        %225 = vmatpush1.msra.mxu0 %v182
        %226 = vmatprep.subr.mxu0 0.0
        %227 = vmatpush1.msra.mxu0 %v183
        %228 = vmatprep.subr.mxu0 0.0
        %229 = vmatpush1.msra.mxu0 %v184
        %230 = vmatprep.subr.mxu0 0.0
        %231 = vmatpush1.msra.mxu0 %v185
        %232 = vmatprep.subr.mxu0 0.0
        %233 = vmatpush1.msra.mxu0 %v186
        %234 = vmatprep.subr.mxu0 0.0
        %235 = vmatpush1.msra.mxu0 %v187
        %236 = vmatprep.subr.mxu0 0.0
        %237 = vmatpush1.msra.mxu0 0.0
        %238 = vmatprep.subr.mxu0 0.0
        %239 = vmatpush1.msra.mxu0 0.0
        %240 = vmatprep.subr.mxu0 0.0
        %241 = vmatpush1.msra.mxu0 0.0
        %242 = vmatprep.subr.mxu0 0.0
        %243 = vmatpush1.msra.mxu0 0.0
        %244 = vmatprep.subr.mxu0 0.0
        %245 = vmatpush1.msra.mxu0 0.0
        %246 = vmatprep.subr.mxu0 0.0
        %247 = vmatpush1.msra.mxu0 0.0
        %248 = vmatprep.subr.mxu0 0.0
        %249 = vmatpush1.msra.mxu0 0.0
        %250 = vmatprep.subr.mxu0 0.0
        %251 = vmatpush1.msra.mxu0 0.0
        %252 = vmatprep.subr.mxu0 0.0
        %253 = vmatpush1.msra.mxu0 0.0
        %254 = vmatprep.subr.mxu0 0.0
        %255 = vmatpush1.msra.mxu0 0.0
        %256 = vmatprep.subr.mxu0 0.0
        %257 = vmatpush1.msra.mxu0 0.0
        %258 = vmatprep.subr.mxu0 0.0
        %259 = vmatpush1.msra.mxu0 0.0
        %260 = vmatprep.subr.mxu0 0.0
        %261 = vmatpush1.msra.mxu0 0.0
        %262 = vmatprep.subr.mxu0 0.0
        %263 = vmatpush1.msra.mxu0 0.0
        %264 = vmatprep.subr.mxu0 0.0
        %265 = vmatpush1.msra.mxu0 0.0
        %266 = vmatprep.subr.mxu0 0.0
        %267 = vmatpush1.msra.mxu0 0.0
        %268 = vmatprep.subr.mxu0 0.0
        %269 = vmatpush1.msra.mxu0 0.0
        %270 = vmatprep.subr.mxu0 0.0
        %271 = vmatpush1.msra.mxu0 0.0
        %272 = vmatprep.subr.mxu0 0.0
        %273 = vmatpush1.msra.mxu0 0.0
        %274 = vmatprep.subr.mxu0 0.0
        %275 = vmatpush1.msra.mxu0 0.0
        %276 = vmatprep.subr.mxu0 0.0
        %277 = vmatpush1.msra.mxu0 0.0
        %278 = vmatprep.subr.mxu0 0.0
        %279 = vmatpush1.msra.mxu0 0.0
        %280 = vmatprep.subr.mxu0 0.0
        %281 = vmatpush1.msra.mxu0 0.0
        %282 = vmatprep.subr.mxu0 0.0
        %283 = vmatpush1.msra.mxu0 0.0
        %284 = vmatprep.mubr.f32.mxu0 0.0
        %285 = vmatmul.mubr.f32.gmra.mrb[0].mxu0 %v197
        %v286 = vpop.f32.mrb[0].mxu0
        %v287 = vadd.f32 %v193, %v286
        %v288 = vpop.f32.mrb[0].mxu0
        %289 = vmatprep.mubr.f32.mxu0 0.0
        %290 = vmatmul.mubr.f32.gmra.mrb[0].mxu0 %v200
        %v291 = vpop.f32.mrb[0].mxu0
        %v292 = vadd.f32 %v193, %v291
        %v293 = vpop.f32.mrb[0].mxu0
        %294 = vmatprep.mubr.f32.mxu0 0.0
        %295 = vmatmul.mubr.f32.gmra.mrb[0].mxu0 %v203
        %v296 = vpop.f32.mrb[0].mxu0
        %v297 = vadd.f32 %v193, %v296
        %v298 = vpop.f32.mrb[0].mxu0
        %299 = vmatprep.mubr.f32.mxu0 0.0
        %300 = vmatmul.mubr.f32.gmra.mrb[0].mxu0 %v206
        %v301 = vpop.f32.mrb[0].mxu0
        %v302 = vadd.f32 %v193, %v301
        %v303 = vpop.f32.mrb[0].mxu0
        %304 = vmatprep.mubr.f32.mxu0 0.0
        %305 = vmatmul.mubr.f32.gmra.mrb[0].mxu0 %v209
        %v306 = vpop.f32.mrb[0].mxu0
        %v307 = vadd.f32 %v193, %v306
        %v308 = vpop.f32.mrb[0].mxu0
        %309 = vmatprep.mubr.f32.mxu0 0.0
        %310 = vmatmul.mubr.f32.gmra.mrb[0].mxu0 %v212
        %v311 = vpop.f32.mrb[0].mxu0
        %v312 = vadd.f32 %v193, %v311
        %v313 = vpop.f32.mrb[0].mxu0
        %314 = vmatprep.mubr.f32.mxu0 0.0
        %315 = vmatmul.mubr.f32.gmra.mrb[0].mxu0 %v215
        %v316 = vpop.f32.mrb[0].mxu0
        %v317 = vadd.f32 %v193, %v316
        %v318 = vpop.f32.mrb[0].mxu0
        %319 = vmatprep.mubr.f32.mxu0 0.0
        %320 = vmatmul.mubr.f32.gmra.mrb[0].mxu0 %v218
        %v321 = vpop.f32.mrb[0].mxu0
        %v322 = vadd.f32 %v193, %v321
        %v323 = vpop.f32.mrb[0].mxu0
        %324 = vdwg.mxu0
        %v325 = vand.u32 2147483647, %v287
        %vm326 = vcmp.le.f32.partialorder %v325, 0.7853982
        %vm327 = vcmp.lt.s32.totalorder %v287, 0
        %v328 = vand.u32 %v287, 2139095040
        %v329 = vshrl.u32 %v328, 23
        %v330 = vsub.s32 %v329, 127
        %v331 = vand.u32 2147483647, %v287
        %v332 = vand.u32 %v331, 8388607
        %v333 = vor.u32 %v332, 8388608
        %v334 = vsub.s32 0, %v333
        %v335 = vadd.s32 %v330, 1
        %vm336 = vcmp.gt.s32.totalorder %v335, 0
        %v337 = vsel %vm336, %v335, 0
        %v338 = vshrl.u32 %v337, 5
        %v339 = vand.u32 %v337, 31
        %v340 = vsub.s32 32, %v339
        %v341 = vshrl.u32 683565275, %v340
        %v342 = vshll.u32 683565275, %v339
        %v343 = vshrl.u32 2475754826, %v340
        %v344 = vor.u32 %v342, %v343
        %v345 = vshll.u32 2475754826, %v339
        %v346 = vshrl.u32 2131351028, %v340
        %v347 = vor.u32 %v345, %v346
        %v348 = vshll.u32 2131351028, %v339
        %v349 = vshrl.u32 2102212464, %v340
        %v350 = vor.u32 %v348, %v349
        %v351 = vshll.u32 2102212464, %v339
        %v352 = vshrl.u32 920167782, %v340
        %v353 = vor.u32 %v351, %v352
        %v354 = vshll.u32 920167782, %v339
        %v355 = vshrl.u32 1326507024, %v340
        %v356 = vor.u32 %v354, %v355
        %vm357 = vcmp.lt.s32.totalorder %v338, 1
        %vm358 = vcmp.lt.s32.totalorder %v338, 2
        %vm359 = vcmp.lt.s32.totalorder %v338, 3
        %vm360 = vcmp.lt.s32.totalorder %v338, 4
        %v361 = vsel %vm357, %v341, %v344
        %v362 = vsel %vm360, %v350, 2102212464
        %v363 = vsel %vm359, %v347, %v362
        %v364 = vsel %vm358, %v361, %v363
        %v365 = vsel %vm357, %v344, %v347
        %v366 = vsel %vm360, %v353, 920167782
        %v367 = vsel %vm359, %v350, %v366
        %v368 = vsel %vm358, %v365, %v367
        %v369 = vsel %vm357, %v347, %v350
        %v370 = vsel %vm360, %v356, 1326507024
        %v371 = vsel %vm359, %v353, %v370
        %v372 = vsel %vm358, %v369, %v371
        %v373 = vshll.u32 %v333, 8
        %v374 = vmul.u32.u64.compose %v373, %v372
        %v375 = vextract.low.u32 %v374
        %v376 = vextract.high.u32 %v374
        %v377 = vmul.u32.u64.compose %v373, %v368
        %v378 = vextract.low.u32 %v377
        %v379 = vextract.high.u32 %v377
        %v380 = vmul.u32 %v373, %v364
        %v381 = vadd.s32 %v376, %v378
        %vm382 = vc.u32 %v376, %v378
        %v383 = vadd.s32 %v379, 1
        %v384 = vsel %vm382, %v383, %v379
        %v385 = vadd.s32 %v380, %v384
        %v386 = vadd.s32 %v385, 536870912
        %v387 = vshrl.u32 %v386, 30
        %v388 = vshll.u32 %v387, 30
        %v389 = vsub.s32 %v385, %v388
        %vm390 = vcmp.lt.s32.totalorder %v389, 0
        %v391 = vsub.s32 0, %v389
        %v392 = vsel %vm390, %v391, %v389
        %v393 = vclz %v392
        %v394 = vsub.s32 %v393, 2
        %vm395 = vcmp.gt.s32.totalorder 0, %v394
        %v396 = vsel %vm395, 0, %v394
        %v397 = vsub.s32 32, %v396
        %v398 = vshll.u32 %v389, %v396
        %v399 = vshrl.u32 %v381, %v397
        %v400 = vor.u32 %v398, %v399
        %v401 = vsub.s32 4294967266, %v396
        %v402 = vadd.s32 %v401, 127
        %v403 = vshll.u32 %v402, 23
        %v404 = vor.u32 4788187, %v403
        %v405 = vand.u32 2147483647, %v404
        %v407 = vcvt.s32.f32 %v400
        %v408 = vmul.f32 %v407, %v405
        %v409 = vxor.u32 %v408, 2147483648
        %v410 = vsel %vm327, %v409, %v408
        %v411 = vsub.s32 4, %v387
        %v412 = vsel %vm327, %v411, %v387
        %v413 = vsel %vm326, %v287, %v410
        %v414 = vsel %vm326, 0, %v412
        %v415 = vcosq.f32.pop %v413
        %v416 = vsinq.f32.pop %v413
        %vm417 = vweird.f32 %v287
        %v418 = vadd.s32 %v414, 3
        %v419 = vand.u32 %v418, 3
        %vm420 = vcmp.lt.s32.totalorder %v419, 2
        %vm421 = vcmp.eq.s32.totalorder %v419, 0
        %v422 = vxor.u32 %v416, 2147483648
        %v423 = vsel %vm421, %v415, %v422
        %vm424 = vcmp.eq.s32.totalorder %v419, 2
        %v425 = vxor.u32 %v415, 2147483648
        %v426 = vsel %vm424, %v425, %v416
        %v427 = vsel %vm420, %v423, %v426
        %v428 = vsel %vm417, nan, %v427
        %v429 = vand.u32 2147483647, %v292
        %vm430 = vcmp.le.f32.partialorder %v429, 0.7853982
        %vm431 = vcmp.lt.s32.totalorder %v292, 0
        %v432 = vand.u32 %v292, 2139095040
        %v433 = vshrl.u32 %v432, 23
        %v434 = vsub.s32 %v433, 127
        %v435 = vand.u32 2147483647, %v292
        %v436 = vand.u32 %v435, 8388607
        %v437 = vor.u32 %v436, 8388608
        %v438 = vsub.s32 0, %v437
        %v439 = vadd.s32 %v434, 1
        %vm440 = vcmp.gt.s32.totalorder %v439, 0
        %v441 = vsel %vm440, %v439, 0
        %v442 = vshrl.u32 %v441, 5
        %v443 = vand.u32 %v441, 31
        %v444 = vsub.s32 32, %v443
        %v445 = vshrl.u32 683565275, %v444
        %v446 = vshll.u32 683565275, %v443
        %v447 = vshrl.u32 2475754826, %v444
        %v448 = vor.u32 %v446, %v447
        %v449 = vshll.u32 2475754826, %v443
        %v450 = vshrl.u32 2131351028, %v444
        %v451 = vor.u32 %v449, %v450
        %v452 = vshll.u32 2131351028, %v443
        %v453 = vshrl.u32 2102212464, %v444
        %v454 = vor.u32 %v452, %v453
        %v455 = vshll.u32 2102212464, %v443
        %v456 = vshrl.u32 920167782, %v444
        %v457 = vor.u32 %v455, %v456
        %v458 = vshll.u32 920167782, %v443
        %v459 = vshrl.u32 1326507024, %v444
        %v460 = vor.u32 %v458, %v459
        %vm461 = vcmp.lt.s32.totalorder %v442, 1
        %vm462 = vcmp.lt.s32.totalorder %v442, 2
        %vm463 = vcmp.lt.s32.totalorder %v442, 3
        %vm464 = vcmp.lt.s32.totalorder %v442, 4
        %v465 = vsel %vm461, %v445, %v448
        %v466 = vsel %vm464, %v454, 2102212464
        %v467 = vsel %vm463, %v451, %v466
        %v468 = vsel %vm462, %v465, %v467
        %v469 = vsel %vm461, %v448, %v451
        %v470 = vsel %vm464, %v457, 920167782
        %v471 = vsel %vm463, %v454, %v470
        %v472 = vsel %vm462, %v469, %v471
        %v473 = vsel %vm461, %v451, %v454
        %v474 = vsel %vm464, %v460, 1326507024
        %v475 = vsel %vm463, %v457, %v474
        %v476 = vsel %vm462, %v473, %v475
        %v477 = vshll.u32 %v437, 8
        %v478 = vmul.u32.u64.compose %v477, %v476
        %v479 = vextract.low.u32 %v478
        %v480 = vextract.high.u32 %v478
        %v481 = vmul.u32.u64.compose %v477, %v472
        %v482 = vextract.low.u32 %v481
        %v483 = vextract.high.u32 %v481
        %v484 = vmul.u32 %v477, %v468
        %v485 = vadd.s32 %v480, %v482
        %vm486 = vc.u32 %v480, %v482
        %v487 = vadd.s32 %v483, 1
        %v488 = vsel %vm486, %v487, %v483
        %v489 = vadd.s32 %v484, %v488
        %v490 = vadd.s32 %v489, 536870912
        %v491 = vshrl.u32 %v490, 30
        %v492 = vshll.u32 %v491, 30
        %v493 = vsub.s32 %v489, %v492
        %vm494 = vcmp.lt.s32.totalorder %v493, 0
        %v495 = vsub.s32 0, %v493
        %v496 = vsel %vm494, %v495, %v493
        %v497 = vclz %v496
        %v498 = vsub.s32 %v497, 2
        %vm499 = vcmp.gt.s32.totalorder 0, %v498
        %v500 = vsel %vm499, 0, %v498
        %v501 = vsub.s32 32, %v500
        %v502 = vshll.u32 %v493, %v500
        %v503 = vshrl.u32 %v485, %v501
        %v504 = vor.u32 %v502, %v503
        %v505 = vsub.s32 4294967266, %v500
        %v506 = vadd.s32 %v505, 127
        %v507 = vshll.u32 %v506, 23
        %v508 = vor.u32 4788187, %v507
        %v509 = vand.u32 2147483647, %v508
        %v511 = vcvt.s32.f32 %v504
        %v512 = vmul.f32 %v511, %v509
        %v513 = vxor.u32 %v512, 2147483648
        %v514 = vsel %vm431, %v513, %v512
        %v515 = vsub.s32 4, %v491
        %v516 = vsel %vm431, %v515, %v491
        %v517 = vsel %vm430, %v292, %v514
        %v518 = vsel %vm430, 0, %v516
        %v519 = vcosq.f32.pop %v517
        %v520 = vsinq.f32.pop %v517
        %vm521 = vweird.f32 %v292
        %v522 = vadd.s32 %v518, 3
        %v523 = vand.u32 %v522, 3
        %vm524 = vcmp.lt.s32.totalorder %v523, 2
        %vm525 = vcmp.eq.s32.totalorder %v523, 0
        %v526 = vxor.u32 %v520, 2147483648
        %v527 = vsel %vm525, %v519, %v526
        %vm528 = vcmp.eq.s32.totalorder %v523, 2
        %v529 = vxor.u32 %v519, 2147483648
        %v530 = vsel %vm528, %v529, %v520
        %v531 = vsel %vm524, %v527, %v530
        %v532 = vsel %vm521, nan, %v531
        %v533 = vand.u32 2147483647, %v297
        %vm534 = vcmp.le.f32.partialorder %v533, 0.7853982
        %vm535 = vcmp.lt.s32.totalorder %v297, 0
        %v536 = vand.u32 %v297, 2139095040
        %v537 = vshrl.u32 %v536, 23
        %v538 = vsub.s32 %v537, 127
        %v539 = vand.u32 2147483647, %v297
        %v540 = vand.u32 %v539, 8388607
        %v541 = vor.u32 %v540, 8388608
        %v542 = vsub.s32 0, %v541
        %v543 = vadd.s32 %v538, 1
        %vm544 = vcmp.gt.s32.totalorder %v543, 0
        %v545 = vsel %vm544, %v543, 0
        %v546 = vshrl.u32 %v545, 5
        %v547 = vand.u32 %v545, 31
        %v548 = vsub.s32 32, %v547
        %v549 = vshrl.u32 683565275, %v548
        %v550 = vshll.u32 683565275, %v547
        %v551 = vshrl.u32 2475754826, %v548
        %v552 = vor.u32 %v550, %v551
        %v553 = vshll.u32 2475754826, %v547
        %v554 = vshrl.u32 2131351028, %v548
        %v555 = vor.u32 %v553, %v554
        %v556 = vshll.u32 2131351028, %v547
        %v557 = vshrl.u32 2102212464, %v548
        %v558 = vor.u32 %v556, %v557
        %v559 = vshll.u32 2102212464, %v547
        %v560 = vshrl.u32 920167782, %v548
        %v561 = vor.u32 %v559, %v560
        %v562 = vshll.u32 920167782, %v547
        %v563 = vshrl.u32 1326507024, %v548
        %v564 = vor.u32 %v562, %v563
        %vm565 = vcmp.lt.s32.totalorder %v546, 1
        %vm566 = vcmp.lt.s32.totalorder %v546, 2
        %vm567 = vcmp.lt.s32.totalorder %v546, 3
        %vm568 = vcmp.lt.s32.totalorder %v546, 4
        %v569 = vsel %vm565, %v549, %v552
        %v570 = vsel %vm568, %v558, 2102212464
        %v571 = vsel %vm567, %v555, %v570
        %v572 = vsel %vm566, %v569, %v571
        %v573 = vsel %vm565, %v552, %v555
        %v574 = vsel %vm568, %v561, 920167782
        %v575 = vsel %vm567, %v558, %v574
        %v576 = vsel %vm566, %v573, %v575
        %v577 = vsel %vm565, %v555, %v558
        %v578 = vsel %vm568, %v564, 1326507024
        %v579 = vsel %vm567, %v561, %v578
        %v580 = vsel %vm566, %v577, %v579
        %v581 = vshll.u32 %v541, 8
        %v582 = vmul.u32.u64.compose %v581, %v580
        %v583 = vextract.low.u32 %v582
        %v584 = vextract.high.u32 %v582
        %v585 = vmul.u32.u64.compose %v581, %v576
        %v586 = vextract.low.u32 %v585
        %v587 = vextract.high.u32 %v585
        %v588 = vmul.u32 %v581, %v572
        %v589 = vadd.s32 %v584, %v586
        %vm590 = vc.u32 %v584, %v586
        %v591 = vadd.s32 %v587, 1
        %v592 = vsel %vm590, %v591, %v587
        %v593 = vadd.s32 %v588, %v592
        %v594 = vadd.s32 %v593, 536870912
        %v595 = vshrl.u32 %v594, 30
        %v596 = vshll.u32 %v595, 30
        %v597 = vsub.s32 %v593, %v596
        %vm598 = vcmp.lt.s32.totalorder %v597, 0
        %v599 = vsub.s32 0, %v597
        %v600 = vsel %vm598, %v599, %v597
        %v601 = vclz %v600
        %v602 = vsub.s32 %v601, 2
        %vm603 = vcmp.gt.s32.totalorder 0, %v602
        %v604 = vsel %vm603, 0, %v602
        %v605 = vsub.s32 32, %v604
        %v606 = vshll.u32 %v597, %v604
        %v607 = vshrl.u32 %v589, %v605
        %v608 = vor.u32 %v606, %v607
        %v609 = vsub.s32 4294967266, %v604
        %v610 = vadd.s32 %v609, 127
        %v611 = vshll.u32 %v610, 23
        %v612 = vor.u32 4788187, %v611
        %v613 = vand.u32 2147483647, %v612
        %v615 = vcvt.s32.f32 %v608
        %v616 = vmul.f32 %v615, %v613
        %v617 = vxor.u32 %v616, 2147483648
        %v618 = vsel %vm535, %v617, %v616
        %v619 = vsub.s32 4, %v595
        %v620 = vsel %vm535, %v619, %v595
        %v621 = vsel %vm534, %v297, %v618
        %v622 = vsel %vm534, 0, %v620
        %v623 = vcosq.f32.pop %v621
        %v624 = vsinq.f32.pop %v621
        %vm625 = vweird.f32 %v297
        %v626 = vadd.s32 %v622, 3
        %v627 = vand.u32 %v626, 3
        %vm628 = vcmp.lt.s32.totalorder %v627, 2
        %vm629 = vcmp.eq.s32.totalorder %v627, 0
        %v630 = vxor.u32 %v624, 2147483648
        %v631 = vsel %vm629, %v623, %v630
        %vm632 = vcmp.eq.s32.totalorder %v627, 2
        %v633 = vxor.u32 %v623, 2147483648
        %v634 = vsel %vm632, %v633, %v624
        %v635 = vsel %vm628, %v631, %v634
        %v636 = vsel %vm625, nan, %v635
        %v637 = vand.u32 2147483647, %v302
        %vm638 = vcmp.le.f32.partialorder %v637, 0.7853982
        %vm639 = vcmp.lt.s32.totalorder %v302, 0
        %v640 = vand.u32 %v302, 2139095040
        %v641 = vshrl.u32 %v640, 23
        %v642 = vsub.s32 %v641, 127
        %v643 = vand.u32 2147483647, %v302
        %v644 = vand.u32 %v643, 8388607
        %v645 = vor.u32 %v644, 8388608
        %v646 = vsub.s32 0, %v645
        %v647 = vadd.s32 %v642, 1
        %vm648 = vcmp.gt.s32.totalorder %v647, 0
        %v649 = vsel %vm648, %v647, 0
        %v650 = vshrl.u32 %v649, 5
        %v651 = vand.u32 %v649, 31
        %v652 = vsub.s32 32, %v651
        %v653 = vshrl.u32 683565275, %v652
        %v654 = vshll.u32 683565275, %v651
        %v655 = vshrl.u32 2475754826, %v652
        %v656 = vor.u32 %v654, %v655
        %v657 = vshll.u32 2475754826, %v651
        %v658 = vshrl.u32 2131351028, %v652
        %v659 = vor.u32 %v657, %v658
        %v660 = vshll.u32 2131351028, %v651
        %v661 = vshrl.u32 2102212464, %v652
        %v662 = vor.u32 %v660, %v661
        %v663 = vshll.u32 2102212464, %v651
        %v664 = vshrl.u32 920167782, %v652
        %v665 = vor.u32 %v663, %v664
        %v666 = vshll.u32 920167782, %v651
        %v667 = vshrl.u32 1326507024, %v652
        %v668 = vor.u32 %v666, %v667
        %vm669 = vcmp.lt.s32.totalorder %v650, 1
        %vm670 = vcmp.lt.s32.totalorder %v650, 2
        %vm671 = vcmp.lt.s32.totalorder %v650, 3
        %vm672 = vcmp.lt.s32.totalorder %v650, 4
        %v673 = vsel %vm669, %v653, %v656
        %v674 = vsel %vm672, %v662, 2102212464
        %v675 = vsel %vm671, %v659, %v674
        %v676 = vsel %vm670, %v673, %v675
        %v677 = vsel %vm669, %v656, %v659
        %v678 = vsel %vm672, %v665, 920167782
        %v679 = vsel %vm671, %v662, %v678
        %v680 = vsel %vm670, %v677, %v679
        %v681 = vsel %vm669, %v659, %v662
        %v682 = vsel %vm672, %v668, 1326507024
        %v683 = vsel %vm671, %v665, %v682
        %v684 = vsel %vm670, %v681, %v683
        %v685 = vshll.u32 %v645, 8
        %v686 = vmul.u32.u64.compose %v685, %v684
        %v687 = vextract.low.u32 %v686
        %v688 = vextract.high.u32 %v686
        %v689 = vmul.u32.u64.compose %v685, %v680
        %v690 = vextract.low.u32 %v689
        %v691 = vextract.high.u32 %v689
        %v692 = vmul.u32 %v685, %v676
        %v693 = vadd.s32 %v688, %v690
        %vm694 = vc.u32 %v688, %v690
        %v695 = vadd.s32 %v691, 1
        %v696 = vsel %vm694, %v695, %v691
        %v697 = vadd.s32 %v692, %v696
        %v698 = vadd.s32 %v697, 536870912
        %v699 = vshrl.u32 %v698, 30
        %v700 = vshll.u32 %v699, 30
        %v701 = vsub.s32 %v697, %v700
        %vm702 = vcmp.lt.s32.totalorder %v701, 0
        %v703 = vsub.s32 0, %v701
        %v704 = vsel %vm702, %v703, %v701
        %v705 = vclz %v704
        %v706 = vsub.s32 %v705, 2
        %vm707 = vcmp.gt.s32.totalorder 0, %v706
        %v708 = vsel %vm707, 0, %v706
        %v709 = vsub.s32 32, %v708
        %v710 = vshll.u32 %v701, %v708
        %v711 = vshrl.u32 %v693, %v709
        %v712 = vor.u32 %v710, %v711
        %v713 = vsub.s32 4294967266, %v708
        %v714 = vadd.s32 %v713, 127
        %v715 = vshll.u32 %v714, 23
        %v716 = vor.u32 4788187, %v715
        %v717 = vand.u32 2147483647, %v716
        %v719 = vcvt.s32.f32 %v712
        %v720 = vmul.f32 %v719, %v717
        %v721 = vxor.u32 %v720, 2147483648
        %v722 = vsel %vm639, %v721, %v720
        %v723 = vsub.s32 4, %v699
        %v724 = vsel %vm639, %v723, %v699
        %v725 = vsel %vm638, %v302, %v722
        %v726 = vsel %vm638, 0, %v724
        %v727 = vcosq.f32.pop %v725
        %v728 = vsinq.f32.pop %v725
        %vm729 = vweird.f32 %v302
        %v730 = vadd.s32 %v726, 3
        %v731 = vand.u32 %v730, 3
        %vm732 = vcmp.lt.s32.totalorder %v731, 2
        %vm733 = vcmp.eq.s32.totalorder %v731, 0
        %v734 = vxor.u32 %v728, 2147483648
        %v735 = vsel %vm733, %v727, %v734
        %vm736 = vcmp.eq.s32.totalorder %v731, 2
        %v737 = vxor.u32 %v727, 2147483648
        %v738 = vsel %vm736, %v737, %v728
        %v739 = vsel %vm732, %v735, %v738
        %v740 = vsel %vm729, nan, %v739
        %v741 = vand.u32 2147483647, %v307
        %vm742 = vcmp.le.f32.partialorder %v741, 0.7853982
        %vm743 = vcmp.lt.s32.totalorder %v307, 0
        %v744 = vand.u32 %v307, 2139095040
        %v745 = vshrl.u32 %v744, 23
        %v746 = vsub.s32 %v745, 127
        %v747 = vand.u32 2147483647, %v307
        %v748 = vand.u32 %v747, 8388607
        %v749 = vor.u32 %v748, 8388608
        %v750 = vsub.s32 0, %v749
        %v751 = vadd.s32 %v746, 1
        %vm752 = vcmp.gt.s32.totalorder %v751, 0
        %v753 = vsel %vm752, %v751, 0
        %v754 = vshrl.u32 %v753, 5
        %v755 = vand.u32 %v753, 31
        %v756 = vsub.s32 32, %v755
        %v757 = vshrl.u32 683565275, %v756
        %v758 = vshll.u32 683565275, %v755
        %v759 = vshrl.u32 2475754826, %v756
        %v760 = vor.u32 %v758, %v759
        %v761 = vshll.u32 2475754826, %v755
        %v762 = vshrl.u32 2131351028, %v756
        %v763 = vor.u32 %v761, %v762
        %v764 = vshll.u32 2131351028, %v755
        %v765 = vshrl.u32 2102212464, %v756
        %v766 = vor.u32 %v764, %v765
        %v767 = vshll.u32 2102212464, %v755
        %v768 = vshrl.u32 920167782, %v756
        %v769 = vor.u32 %v767, %v768
        %v770 = vshll.u32 920167782, %v755
        %v771 = vshrl.u32 1326507024, %v756
        %v772 = vor.u32 %v770, %v771
        %vm773 = vcmp.lt.s32.totalorder %v754, 1
        %vm774 = vcmp.lt.s32.totalorder %v754, 2
        %vm775 = vcmp.lt.s32.totalorder %v754, 3
        %vm776 = vcmp.lt.s32.totalorder %v754, 4
        %v777 = vsel %vm773, %v757, %v760
        %v778 = vsel %vm776, %v766, 2102212464
        %v779 = vsel %vm775, %v763, %v778
        %v780 = vsel %vm774, %v777, %v779
        %v781 = vsel %vm773, %v760, %v763
        %v782 = vsel %vm776, %v769, 920167782
        %v783 = vsel %vm775, %v766, %v782
        %v784 = vsel %vm774, %v781, %v783
        %v785 = vsel %vm773, %v763, %v766
        %v786 = vsel %vm776, %v772, 1326507024
        %v787 = vsel %vm775, %v769, %v786
        %v788 = vsel %vm774, %v785, %v787
        %v789 = vshll.u32 %v749, 8
        %v790 = vmul.u32.u64.compose %v789, %v788
        %v791 = vextract.low.u32 %v790
        %v792 = vextract.high.u32 %v790
        %v793 = vmul.u32.u64.compose %v789, %v784
        %v794 = vextract.low.u32 %v793
        %v795 = vextract.high.u32 %v793
        %v796 = vmul.u32 %v789, %v780
        %v797 = vadd.s32 %v792, %v794
        %vm798 = vc.u32 %v792, %v794
        %v799 = vadd.s32 %v795, 1
        %v800 = vsel %vm798, %v799, %v795
        %v801 = vadd.s32 %v796, %v800
        %v802 = vadd.s32 %v801, 536870912
        %v803 = vshrl.u32 %v802, 30
        %v804 = vshll.u32 %v803, 30
        %v805 = vsub.s32 %v801, %v804
        %vm806 = vcmp.lt.s32.totalorder %v805, 0
        %v807 = vsub.s32 0, %v805
        %v808 = vsel %vm806, %v807, %v805
        %v809 = vclz %v808
        %v810 = vsub.s32 %v809, 2
        %vm811 = vcmp.gt.s32.totalorder 0, %v810
        %v812 = vsel %vm811, 0, %v810
        %v813 = vsub.s32 32, %v812
        %v814 = vshll.u32 %v805, %v812
        %v815 = vshrl.u32 %v797, %v813
        %v816 = vor.u32 %v814, %v815
        %v817 = vsub.s32 4294967266, %v812
        %v818 = vadd.s32 %v817, 127
        %v819 = vshll.u32 %v818, 23
        %v820 = vor.u32 4788187, %v819
        %v821 = vand.u32 2147483647, %v820
        %v823 = vcvt.s32.f32 %v816
        %v824 = vmul.f32 %v823, %v821
        %v825 = vxor.u32 %v824, 2147483648
        %v826 = vsel %vm743, %v825, %v824
        %v827 = vsub.s32 4, %v803
        %v828 = vsel %vm743, %v827, %v803
        %v829 = vsel %vm742, %v307, %v826
        %v830 = vsel %vm742, 0, %v828
        %v831 = vcosq.f32.pop %v829
        %v832 = vsinq.f32.pop %v829
        %vm833 = vweird.f32 %v307
        %v834 = vadd.s32 %v830, 3
        %v835 = vand.u32 %v834, 3
        %vm836 = vcmp.lt.s32.totalorder %v835, 2
        %vm837 = vcmp.eq.s32.totalorder %v835, 0
        %v838 = vxor.u32 %v832, 2147483648
        %v839 = vsel %vm837, %v831, %v838
        %vm840 = vcmp.eq.s32.totalorder %v835, 2
        %v841 = vxor.u32 %v831, 2147483648
        %v842 = vsel %vm840, %v841, %v832
        %v843 = vsel %vm836, %v839, %v842
        %v844 = vsel %vm833, nan, %v843
        %v845 = vand.u32 2147483647, %v312
        %vm846 = vcmp.le.f32.partialorder %v845, 0.7853982
        %vm847 = vcmp.lt.s32.totalorder %v312, 0
        %v848 = vand.u32 %v312, 2139095040
        %v849 = vshrl.u32 %v848, 23
        %v850 = vsub.s32 %v849, 127
        %v851 = vand.u32 2147483647, %v312
        %v852 = vand.u32 %v851, 8388607
        %v853 = vor.u32 %v852, 8388608
        %v854 = vsub.s32 0, %v853
        %v855 = vadd.s32 %v850, 1
        %vm856 = vcmp.gt.s32.totalorder %v855, 0
        %v857 = vsel %vm856, %v855, 0
        %v858 = vshrl.u32 %v857, 5
        %v859 = vand.u32 %v857, 31
        %v860 = vsub.s32 32, %v859
        %v861 = vshrl.u32 683565275, %v860
        %v862 = vshll.u32 683565275, %v859
        %v863 = vshrl.u32 2475754826, %v860
        %v864 = vor.u32 %v862, %v863
        %v865 = vshll.u32 2475754826, %v859
        %v866 = vshrl.u32 2131351028, %v860
        %v867 = vor.u32 %v865, %v866
        %v868 = vshll.u32 2131351028, %v859
        %v869 = vshrl.u32 2102212464, %v860
        %v870 = vor.u32 %v868, %v869
        %v871 = vshll.u32 2102212464, %v859
        %v872 = vshrl.u32 920167782, %v860
        %v873 = vor.u32 %v871, %v872
        %v874 = vshll.u32 920167782, %v859
        %v875 = vshrl.u32 1326507024, %v860
        %v876 = vor.u32 %v874, %v875
        %vm877 = vcmp.lt.s32.totalorder %v858, 1
        %vm878 = vcmp.lt.s32.totalorder %v858, 2
        %vm879 = vcmp.lt.s32.totalorder %v858, 3
        %vm880 = vcmp.lt.s32.totalorder %v858, 4
        %v881 = vsel %vm877, %v861, %v864
        %v882 = vsel %vm880, %v870, 2102212464
        %v883 = vsel %vm879, %v867, %v882
        %v884 = vsel %vm878, %v881, %v883
        %v885 = vsel %vm877, %v864, %v867
        %v886 = vsel %vm880, %v873, 920167782
        %v887 = vsel %vm879, %v870, %v886
        %v888 = vsel %vm878, %v885, %v887
        %v889 = vsel %vm877, %v867, %v870
        %v890 = vsel %vm880, %v876, 1326507024
        %v891 = vsel %vm879, %v873, %v890
        %v892 = vsel %vm878, %v889, %v891
        %v893 = vshll.u32 %v853, 8
        %v894 = vmul.u32.u64.compose %v893, %v892
        %v895 = vextract.low.u32 %v894
        %v896 = vextract.high.u32 %v894
        %v897 = vmul.u32.u64.compose %v893, %v888
        %v898 = vextract.low.u32 %v897
        %v899 = vextract.high.u32 %v897
        %v900 = vmul.u32 %v893, %v884
        %v901 = vadd.s32 %v896, %v898
        %vm902 = vc.u32 %v896, %v898
        %v903 = vadd.s32 %v899, 1
        %v904 = vsel %vm902, %v903, %v899
        %v905 = vadd.s32 %v900, %v904
        %v906 = vadd.s32 %v905, 536870912
        %v907 = vshrl.u32 %v906, 30
        %v908 = vshll.u32 %v907, 30
        %v909 = vsub.s32 %v905, %v908
        %vm910 = vcmp.lt.s32.totalorder %v909, 0
        %v911 = vsub.s32 0, %v909
        %v912 = vsel %vm910, %v911, %v909
        %v913 = vclz %v912
        %v914 = vsub.s32 %v913, 2
        %vm915 = vcmp.gt.s32.totalorder 0, %v914
        %v916 = vsel %vm915, 0, %v914
        %v917 = vsub.s32 32, %v916
        %v918 = vshll.u32 %v909, %v916
        %v919 = vshrl.u32 %v901, %v917
        %v920 = vor.u32 %v918, %v919
        %v921 = vsub.s32 4294967266, %v916
        %v922 = vadd.s32 %v921, 127
        %v923 = vshll.u32 %v922, 23
        %v924 = vor.u32 4788187, %v923
        %v925 = vand.u32 2147483647, %v924
        %v927 = vcvt.s32.f32 %v920
        %v928 = vmul.f32 %v927, %v925
        %v929 = vxor.u32 %v928, 2147483648
        %v930 = vsel %vm847, %v929, %v928
        %v931 = vsub.s32 4, %v907
        %v932 = vsel %vm847, %v931, %v907
        %v933 = vsel %vm846, %v312, %v930
        %v934 = vsel %vm846, 0, %v932
        %v935 = vcosq.f32.pop %v933
        %v936 = vsinq.f32.pop %v933
        %vm937 = vweird.f32 %v312
        %v938 = vadd.s32 %v934, 3
        %v939 = vand.u32 %v938, 3
        %vm940 = vcmp.lt.s32.totalorder %v939, 2
        %vm941 = vcmp.eq.s32.totalorder %v939, 0
        %v942 = vxor.u32 %v936, 2147483648
        %v943 = vsel %vm941, %v935, %v942
        %vm944 = vcmp.eq.s32.totalorder %v939, 2
        %v945 = vxor.u32 %v935, 2147483648
        %v946 = vsel %vm944, %v945, %v936
        %v947 = vsel %vm940, %v943, %v946
        %v948 = vsel %vm937, nan, %v947
        %v949 = vand.u32 2147483647, %v317
        %vm950 = vcmp.le.f32.partialorder %v949, 0.7853982
        %vm951 = vcmp.lt.s32.totalorder %v317, 0
        %v952 = vand.u32 %v317, 2139095040
        %v953 = vshrl.u32 %v952, 23
        %v954 = vsub.s32 %v953, 127
        %v955 = vand.u32 2147483647, %v317
        %v956 = vand.u32 %v955, 8388607
        %v957 = vor.u32 %v956, 8388608
        %v958 = vsub.s32 0, %v957
        %v959 = vadd.s32 %v954, 1
        %vm960 = vcmp.gt.s32.totalorder %v959, 0
        %v961 = vsel %vm960, %v959, 0
        %v962 = vshrl.u32 %v961, 5
        %v963 = vand.u32 %v961, 31
        %v964 = vsub.s32 32, %v963
        %v965 = vshrl.u32 683565275, %v964
        %v966 = vshll.u32 683565275, %v963
        %v967 = vshrl.u32 2475754826, %v964
        %v968 = vor.u32 %v966, %v967
        %v969 = vshll.u32 2475754826, %v963
        %v970 = vshrl.u32 2131351028, %v964
        %v971 = vor.u32 %v969, %v970
        %v972 = vshll.u32 2131351028, %v963
        %v973 = vshrl.u32 2102212464, %v964
        %v974 = vor.u32 %v972, %v973
        %v975 = vshll.u32 2102212464, %v963
        %v976 = vshrl.u32 920167782, %v964
        %v977 = vor.u32 %v975, %v976
        %v978 = vshll.u32 920167782, %v963
        %v979 = vshrl.u32 1326507024, %v964
        %v980 = vor.u32 %v978, %v979
        %vm981 = vcmp.lt.s32.totalorder %v962, 1
        %vm982 = vcmp.lt.s32.totalorder %v962, 2
        %vm983 = vcmp.lt.s32.totalorder %v962, 3
        %vm984 = vcmp.lt.s32.totalorder %v962, 4
        %v985 = vsel %vm981, %v965, %v968
        %v986 = vsel %vm984, %v974, 2102212464
        %v987 = vsel %vm983, %v971, %v986
        %v988 = vsel %vm982, %v985, %v987
        %v989 = vsel %vm981, %v968, %v971
        %v990 = vsel %vm984, %v977, 920167782
        %v991 = vsel %vm983, %v974, %v990
        %v992 = vsel %vm982, %v989, %v991
        %v993 = vsel %vm981, %v971, %v974
        %v994 = vsel %vm984, %v980, 1326507024
        %v995 = vsel %vm983, %v977, %v994
        %v996 = vsel %vm982, %v993, %v995
        %v997 = vshll.u32 %v957, 8
        %v998 = vmul.u32.u64.compose %v997, %v996
        %v999 = vextract.low.u32 %v998
        %v1000 = vextract.high.u32 %v998
        %v1001 = vmul.u32.u64.compose %v997, %v992
        %v1002 = vextract.low.u32 %v1001
        %v1003 = vextract.high.u32 %v1001
        %v1004 = vmul.u32 %v997, %v988
        %v1005 = vadd.s32 %v1000, %v1002
        %vm1006 = vc.u32 %v1000, %v1002
        %v1007 = vadd.s32 %v1003, 1
        %v1008 = vsel %vm1006, %v1007, %v1003
        %v1009 = vadd.s32 %v1004, %v1008
        %v1010 = vadd.s32 %v1009, 536870912
        %v1011 = vshrl.u32 %v1010, 30
        %v1012 = vshll.u32 %v1011, 30
        %v1013 = vsub.s32 %v1009, %v1012
        %vm1014 = vcmp.lt.s32.totalorder %v1013, 0
        %v1015 = vsub.s32 0, %v1013
        %v1016 = vsel %vm1014, %v1015, %v1013
        %v1017 = vclz %v1016
        %v1018 = vsub.s32 %v1017, 2
        %vm1019 = vcmp.gt.s32.totalorder 0, %v1018
        %v1020 = vsel %vm1019, 0, %v1018
        %v1021 = vsub.s32 32, %v1020
        %v1022 = vshll.u32 %v1013, %v1020
        %v1023 = vshrl.u32 %v1005, %v1021
        %v1024 = vor.u32 %v1022, %v1023
        %v1025 = vsub.s32 4294967266, %v1020
        %v1026 = vadd.s32 %v1025, 127
        %v1027 = vshll.u32 %v1026, 23
        %v1028 = vor.u32 4788187, %v1027
        %v1029 = vand.u32 2147483647, %v1028
        %v1031 = vcvt.s32.f32 %v1024
        %v1032 = vmul.f32 %v1031, %v1029
        %v1033 = vxor.u32 %v1032, 2147483648
        %v1034 = vsel %vm951, %v1033, %v1032
        %v1035 = vsub.s32 4, %v1011
        %v1036 = vsel %vm951, %v1035, %v1011
        %v1037 = vsel %vm950, %v317, %v1034
        %v1038 = vsel %vm950, 0, %v1036
        %v1039 = vcosq.f32.pop %v1037
        %v1040 = vsinq.f32.pop %v1037
        %vm1041 = vweird.f32 %v317
        %v1042 = vadd.s32 %v1038, 3
        %v1043 = vand.u32 %v1042, 3
        %vm1044 = vcmp.lt.s32.totalorder %v1043, 2
        %vm1045 = vcmp.eq.s32.totalorder %v1043, 0
        %v1046 = vxor.u32 %v1040, 2147483648
        %v1047 = vsel %vm1045, %v1039, %v1046
        %vm1048 = vcmp.eq.s32.totalorder %v1043, 2
        %v1049 = vxor.u32 %v1039, 2147483648
        %v1050 = vsel %vm1048, %v1049, %v1040
        %v1051 = vsel %vm1044, %v1047, %v1050
        %v1052 = vsel %vm1041, nan, %v1051
        %v1053 = vand.u32 2147483647, %v322
        %vm1054 = vcmp.le.f32.partialorder %v1053, 0.7853982
        %vm1055 = vcmp.lt.s32.totalorder %v322, 0
        %v1056 = vand.u32 %v322, 2139095040
        %v1057 = vshrl.u32 %v1056, 23
        %v1058 = vsub.s32 %v1057, 127
        %v1059 = vand.u32 2147483647, %v322
        %v1060 = vand.u32 %v1059, 8388607
        %v1061 = vor.u32 %v1060, 8388608
        %v1062 = vsub.s32 0, %v1061
        %v1063 = vadd.s32 %v1058, 1
        %vm1064 = vcmp.gt.s32.totalorder %v1063, 0
        %v1065 = vsel %vm1064, %v1063, 0
        %v1066 = vshrl.u32 %v1065, 5
        %v1067 = vand.u32 %v1065, 31
        %v1068 = vsub.s32 32, %v1067
        %v1069 = vshrl.u32 683565275, %v1068
        %v1070 = vshll.u32 683565275, %v1067
        %v1071 = vshrl.u32 2475754826, %v1068
        %v1072 = vor.u32 %v1070, %v1071
        %v1073 = vshll.u32 2475754826, %v1067
        %v1074 = vshrl.u32 2131351028, %v1068
        %v1075 = vor.u32 %v1073, %v1074
        %v1076 = vshll.u32 2131351028, %v1067
        %v1077 = vshrl.u32 2102212464, %v1068
        %v1078 = vor.u32 %v1076, %v1077
        %v1079 = vshll.u32 2102212464, %v1067
        %v1080 = vshrl.u32 920167782, %v1068
        %v1081 = vor.u32 %v1079, %v1080
        %v1082 = vshll.u32 920167782, %v1067
        %v1083 = vshrl.u32 1326507024, %v1068
        %v1084 = vor.u32 %v1082, %v1083
        %vm1085 = vcmp.lt.s32.totalorder %v1066, 1
        %vm1086 = vcmp.lt.s32.totalorder %v1066, 2
        %vm1087 = vcmp.lt.s32.totalorder %v1066, 3
        %vm1088 = vcmp.lt.s32.totalorder %v1066, 4
        %v1089 = vsel %vm1085, %v1069, %v1072
        %v1090 = vsel %vm1088, %v1078, 2102212464
        %v1091 = vsel %vm1087, %v1075, %v1090
        %v1092 = vsel %vm1086, %v1089, %v1091
        %v1093 = vsel %vm1085, %v1072, %v1075
        %v1094 = vsel %vm1088, %v1081, 920167782
        %v1095 = vsel %vm1087, %v1078, %v1094
        %v1096 = vsel %vm1086, %v1093, %v1095
        %v1097 = vsel %vm1085, %v1075, %v1078
        %v1098 = vsel %vm1088, %v1084, 1326507024
        %v1099 = vsel %vm1087, %v1081, %v1098
        %v1100 = vsel %vm1086, %v1097, %v1099
        %v1101 = vshll.u32 %v1061, 8
        %v1102 = vmul.u32.u64.compose %v1101, %v1100
        %v1103 = vextract.low.u32 %v1102
        %v1104 = vextract.high.u32 %v1102
        %v1105 = vmul.u32.u64.compose %v1101, %v1096
        %v1106 = vextract.low.u32 %v1105
        %v1107 = vextract.high.u32 %v1105
        %v1108 = vmul.u32 %v1101, %v1092
        %v1109 = vadd.s32 %v1104, %v1106
        %vm1110 = vc.u32 %v1104, %v1106
        %v1111 = vadd.s32 %v1107, 1
        %v1112 = vsel %vm1110, %v1111, %v1107
        %v1113 = vadd.s32 %v1108, %v1112
        %v1114 = vadd.s32 %v1113, 536870912
        %v1115 = vshrl.u32 %v1114, 30
        %v1116 = vshll.u32 %v1115, 30
        %v1117 = vsub.s32 %v1113, %v1116
        %vm1118 = vcmp.lt.s32.totalorder %v1117, 0
        %v1119 = vsub.s32 0, %v1117
        %v1120 = vsel %vm1118, %v1119, %v1117
        %v1121 = vclz %v1120
        %v1122 = vsub.s32 %v1121, 2
        %vm1123 = vcmp.gt.s32.totalorder 0, %v1122
        %v1124 = vsel %vm1123, 0, %v1122
        %v1125 = vsub.s32 32, %v1124
        %v1126 = vshll.u32 %v1117, %v1124
        %v1127 = vshrl.u32 %v1109, %v1125
        %v1128 = vor.u32 %v1126, %v1127
        %v1129 = vsub.s32 4294967266, %v1124
        %v1130 = vadd.s32 %v1129, 127
        %v1131 = vshll.u32 %v1130, 23
        %v1132 = vor.u32 4788187, %v1131
        %v1133 = vand.u32 2147483647, %v1132
        %v1135 = vcvt.s32.f32 %v1128
        %v1136 = vmul.f32 %v1135, %v1133
        %v1137 = vxor.u32 %v1136, 2147483648
        %v1138 = vsel %vm1055, %v1137, %v1136
        %v1139 = vsub.s32 4, %v1115
        %v1140 = vsel %vm1055, %v1139, %v1115
        %v1141 = vsel %vm1054, %v322, %v1138
        %v1142 = vsel %vm1054, 0, %v1140
        %v1143 = vcosq.f32.pop %v1141
        %v1144 = vsinq.f32.pop %v1141
        %vm1145 = vweird.f32 %v322
        %v1146 = vadd.s32 %v1142, 3
        %v1147 = vand.u32 %v1146, 3
        %vm1148 = vcmp.lt.s32.totalorder %v1147, 2
        %vm1149 = vcmp.eq.s32.totalorder %v1147, 0
        %v1150 = vxor.u32 %v1144, 2147483648
        %v1151 = vsel %vm1149, %v1143, %v1150
        %vm1152 = vcmp.eq.s32.totalorder %v1147, 2
        %v1153 = vxor.u32 %v1143, 2147483648
        %v1154 = vsel %vm1152, %v1153, %v1144
        %v1155 = vsel %vm1148, %v1151, %v1154
        %v1156 = vsel %vm1145, nan, %v1155
        %1157 = vst [vmem:[%s164] sm:$0xff] %v428
        %1158 = vst [vmem:[%s164 + $0x8] sm:$0xff] %v532
        %1159 = vst [vmem:[%s164 + $0x10] sm:$0xff] %v636
        %1160 = vst [vmem:[%s164 + $0x18] sm:$0xff] %v740
        %1161 = vst [vmem:[%s164 + $0x20] sm:$0xff] %v844
        %1162 = vst [vmem:[%s164 + $0x28] sm:$0xff] %v948
        %1163 = vst [vmem:[%s164 + $0x30] sm:$0xff] %v1052
        %1164 = vst [vmem:[%s164 + $0x38] sm:$0xff] %v1156
        %s1165 = sand.u32 %s93, 1
        %s1166 = scalar_lea.sflag [#allocation3], %s1165
        %s1167 = sand.u32 %s93, 1
        %s1168 = smul.addr %s1167, 64
        %s1169 = scalar_lea.vmem [#allocation2], %s1168
        // Predicated region
        $region33: #{tpu_custom_call.1} parent=31 // pred_check
          %p1170 = pneg %p103
        $region34: #{tpu_custom_call.1} parent=31 // pred_check_branch
          %1172 = sbr.rel (%p1170) target = $region36
        $region35: #{tpu_custom_call.1} parent=31 // pred_region
          %s1173 = smul.u32 8, %s17
          %s1175 = ssub.s32 1024, 1024
          %1176 = vsyncadd %s1166, %s1175
          %s1177 = smul.addr %s1173, 128
          %s1178 = scalar_lea.hbm %s3, %s1177
          %s1179 = sshll.u32 %s1169, 4
          %s1180 = int_to_ptr.vmem [resolvable:$true] %s1179
          %1185 = dma.vmem_to_hbm [thread:$0]  %s1180, 1024, %s1178, %s1166, 128, 128, 8
        $region36: #{tpu_custom_call.1} parent=31 // pred_fallthru
          _
      $region32: #{tpu_custom_call.1} parent=5 // pred_fallthru
        _
      %p1186 = scmp.le.s32.totalorder 2, %s12
      // Predicated region
      $region37: #{tpu_custom_call.1} parent=5 // pred_check
        %p1187 = pneg %p1186
      $region38: #{tpu_custom_call.1} parent=5 // pred_check_branch
        %1189 = sbr.rel (%p1187) target = $region40
      $region39: #{tpu_custom_call.1} parent=5 // pred_region
        %s1190 = ssub.s32 %s12, 2
        // Predicated region
        $region41: #{tpu_custom_call.1} parent=39 // pred_check
          %p1191 = pneg %p109
        $region42: #{tpu_custom_call.1} parent=39 // pred_check_branch
          %1193 = sbr.rel (%p1191) target = $region44
        $region43: #{tpu_custom_call.1} parent=39 // pred_region
          %s1194 = sand.u32 %s94, 1
          %s1195 = scalar_lea.sflag [#allocation3], %s1194
          %s1196 = sand.u32 %s94, 1
          %s1197 = smul.addr %s1196, 64
          %s1198 = scalar_lea.vmem [#allocation2], %s1197
          %1199 = dma.done %s1195, 1024
        $region44: #{tpu_custom_call.1} parent=39 // pred_fallthru
          _
      $region40: #{tpu_custom_call.1} parent=5 // pred_fallthru
        _
    $region6: #{tpu_custom_call.1} parent=1 // loop_footer
      %s16 = sadd.s32 1, %s12
    $region7: #{tpu_custom_call.1} parent=1 // loop_footer_branch
      %11 = sbr.rel target = $region3
    $region8: #{tpu_custom_call.1} parent=1 // loop_exit
      _
    %1200 = vsyncpa [#allocation3], 1
    %s1201 = scalar_lea.sflag [#allocation3], 1
    %1202 = vsyncpa %s1201, 1

</llo_original>
